<compile_context>
chip_gen: v6e
topology: v6e:2x2x1
jax: 0.10.0
libtpu: 0.0.40
codegen_flags: <defaults>
</compile_context>

<pallas_src>
import functools
import math

import jax
import jax.numpy as jnp
from jax.experimental import pallas as pl
from jax.experimental.pallas import tpu as pltpu


def _round_up(a, m):
    return ((a + m - 1) // m) * m


def _default_vmem_limit():
    try:
        cap = int(pltpu.get_tpu_info().vmem_capacity_bytes)
    except Exception:
        cap = 64 * 1024 * 1024  # conservative (v7x-sized) fallback
    # leave headroom; cap at ~100 MiB on 128 MiB parts (v5e/v6e), ~56 MiB on v7x
    return int(min(cap - 8 * 1024 * 1024, 100 * 1024 * 1024))


def _vmem_estimate(tile, Dp, Hp, isz):
    """Rough per-step VMEM footprint (double-buffered streams + residents)."""
    est = 2 * tile * Dp * isz            # x (query rows)
    est += 2 * tile * 2 * Hp * isz       # rhs = [exp(K)*V | exp(K)]
    est += 2 * tile * tile * isz         # band-correction tile C
    est += 2 * 2 * Hp * 4                # column sum
    est += 2 * Dp * Hp * isz             # wq + wo (single buffered)
    est += (Hp + Dp) * 4                 # bq + bo
    est += tile * 2 * Hp * 4             # f32 accumulator scratch
    est += 2 * tile * Dp * 4             # output tile (f32)
    return est


def _band_correction(wbias, T, Tp, s, dtype):
    """C = exp(masked wbias) - 1  (zero outside the |i-j| < s band), padded."""
    wb = wbias[:T, :T]
    ii = jnp.arange(T)[:, None]
    jj = jnp.arange(T)[None, :]
    c = jnp.where(jnp.abs(ii - jj) < s, jnp.exp(wb) - 1.0, 0.0)
    if Tp > T:
        c = jnp.pad(c, ((0, Tp - T), (0, Tp - T)))
    return c.astype(dtype)


def _aft_local_kernel(Hp, mxu_dtype, approx_recip,
                      base_ref,                       # scalar prefetch (SMEM)
                      x_ref, rhs_ref, cs_ref, c_ref,
                      wq_ref, bq_ref, wo_ref, bo_ref,
                      out_ref, acc_ref):
    del base_ref  # only used by the index_maps
    kj = pl.program_id(2)

    # --- init accumulator with the all-ones ("outside the band") contribution
    @pl.when(kj == 0)
    def _init():
        acc_ref[...] = jnp.broadcast_to(cs_ref[0], acc_ref.shape)

    # --- banded correction:  acc += (exp(wb)-1) @ [exp(K)*V | exp(K)] -------
    acc_ref[...] += jnp.dot(c_ref[...], rhs_ref[0],
                            preferred_element_type=jnp.float32)

    # --- finalize: Q projection, gating, normalization, output projection ---
    @pl.when(kj == pl.num_programs(2) - 1)
    def _finalize():
        q = jnp.dot(x_ref[0], wq_ref[...],
                    preferred_element_type=jnp.float32) + bq_ref[...]
        acc = acc_ref[...]
        num = acc[:, :Hp]
        den = acc[:, Hp:]
        if approx_recip:
            weighted = num * pl.reciprocal(den, approx=True)
        else:
            weighted = num / den
        yt = jax.nn.sigmoid(q) * weighted               # (tile, Hp) f32
        out = jnp.dot(yt.astype(mxu_dtype), wo_ref[...],
                      preferred_element_type=jnp.float32) + bo_ref[...]
        out_ref[0] = out.astype(out_ref.dtype)


def aft_local_forward(x, params, *, s, mxu_dtype=jnp.bfloat16,
                      approx_recip=True, tile_cap=512, vmem_limit_bytes=None):
    """x: (B, T, D) float32.  Returns (B, T, D)."""
    B, T, D = x.shape
    H = params["wq"].shape[1]
    f32 = jnp.float32
    isz = jnp.dtype(mxu_dtype).itemsize

    if vmem_limit_bytes is None:
        vmem_limit_bytes = _default_vmem_limit()
    tile_cap = max(128, (tile_cap // 128) * 128)

    # Pad feature dims to 128 (lane-dense output store, aligned num/den slices).
    Dp = _round_up(D, 128)
    Hp = _round_up(H, 128)

    # ---- sequence tile selection + T padding -------------------------------
    if _round_up(T, 8) <= tile_cap:
        tile = _round_up(T, 8)              # single seq tile, full-extent block
    else:
        tile = tile_cap                     # multiple of 128
    if tile % 128 == 0:
        budget = int(0.6 * vmem_limit_bytes)
        while tile > 128 and _vmem_estimate(tile, Dp, Hp, isz) > budget:
            tile -= 128
        # v7x megacore: keep at least 2 parallel grid steps (B * num_q_tiles).
        if B * (_round_up(T, tile) // tile) < 2 and tile >= 256:
            tile = max(128, (tile // 2) // 128 * 128)
    Tp = _round_up(T, tile)
    n_q = n_kv = Tp // tile

    # ---- band-restricted kv window (AFT-Local) ------------------------------
    span = tile + 2 * (s - 1)                       # columns touched by a q tile
    n_band = max(1, min(n_kv, -(-span // tile) + 1))
    base_tbl = jnp.asarray(
        [min(max(0, qi * tile - (s - 1)) // tile, n_kv - n_band)
         for qi in range(n_q)],
        dtype=jnp.int32)

    # ---- wrapper-side precompute (one XLA GEMM, batch-wide) -----------------
    k = x @ params["wk"] + params["bk"]             # (B, T, H) f32
    v = x @ params["wv"] + params["bv"]
    ek = jnp.exp(k)
    num_part = jnp.pad(ek * v, ((0, 0), (0, 0), (0, Hp - H)))
    den_part = jnp.pad(ek, ((0, 0), (0, 0), (0, Hp - H)), constant_values=1.0)
    rhs = jnp.concatenate([num_part, den_part], axis=-1)        # (B, T, 2Hp) f32
    colsum = jnp.sum(rhs, axis=1, keepdims=True)                # (B, 1, 2Hp) f32
    rhs = jnp.pad(rhs, ((0, 0), (0, Tp - T), (0, 0))).astype(mxu_dtype)

    c_band = _band_correction(params["wbias"], T, Tp, s, mxu_dtype)

    x_p = jnp.pad(x, ((0, 0), (0, Tp - T), (0, Dp - D))).astype(mxu_dtype)
    wq_p = jnp.pad(params["wq"], ((0, Dp - D), (0, Hp - H))).astype(mxu_dtype)
    bq_p = jnp.pad(params["bq"], ((0, 0), (0, Hp - H))).astype(f32)
    wo_p = jnp.pad(params["wo"], ((0, Hp - H), (0, Dp - D))).astype(mxu_dtype)
    bo_p = jnp.pad(params["bo"], ((0, 0), (0, Dp - D))).astype(f32)

    kernel = functools.partial(_aft_local_kernel, Hp, mxu_dtype, approx_recip)

    def wspec(shape):
        # Constant-index weight blocks: single-buffered (no dead second copy).
        return pl.BlockSpec(shape, lambda b, qi, kj, base: (0,) * len(shape),
                            pipeline_mode=pl.Buffered(1))

    grid_spec = pltpu.PrefetchScalarGridSpec(
        num_scalar_prefetch=1,                       # base_tbl -> SMEM
        grid=(B, n_q, n_band),
        in_specs=[
            pl.BlockSpec((1, tile, Dp), lambda b, qi, kj, base: (b, qi, 0)),
            pl.BlockSpec((1, tile, 2 * Hp),
                         lambda b, qi, kj, base: (b, base[qi] + kj, 0)),
            pl.BlockSpec((1, 1, 2 * Hp), lambda b, qi, kj, base: (b, 0, 0)),
            pl.BlockSpec((tile, tile),
                         lambda b, qi, kj, base: (qi, base[qi] + kj)),
            wspec((Dp, Hp)),
            wspec((1, Hp)),
            wspec((Hp, Dp)),
            wspec((1, Dp)),
        ],
        out_specs=pl.BlockSpec((1, tile, Dp), lambda b, qi, kj, base: (b, qi, 0)),
        scratch_shapes=[pltpu.VMEM((tile, 2 * Hp), jnp.float32)],   # [num | den]
    )

    out = pl.pallas_call(
        kernel,
        out_shape=jax.ShapeDtypeStruct((B, Tp, Dp), x.dtype),
        grid_spec=grid_spec,
        compiler_params=pltpu.CompilerParams(
            dimension_semantics=("parallel", "parallel", "arbitrary"),
            vmem_limit_bytes=vmem_limit_bytes,
        ),
    )(base_tbl, x_p, rhs, colsum, c_band, wq_p, bq_p, wo_p, bo_p)

    return out[:, :T, :D]


def aft_local_reference(x, params, *, s):
    """Pure-JAX reference matching the PyTorch forward semantics."""
    q = x @ params["wq"] + params["bq"]
    k = x @ params["wk"] + params["bk"]
    v = x @ params["wv"] + params["bv"]
    T = x.shape[1]

    wb = params["wbias"]
    ii = jnp.arange(wb.shape[0])[:, None]
    jj = jnp.arange(wb.shape[1])[None, :]
    wb = jnp.where(jnp.abs(ii - jj) < s, wb, 0.0)
    temp_wbias = wb[:T, :T][None, :, :]

    q_sig = jax.nn.sigmoid(q)
    temp = jnp.exp(temp_wbias) @ (jnp.exp(k) * v)
    weighted = temp / (jnp.exp(temp_wbias) @ jnp.exp(k))
    yt = q_sig * weighted
    return yt @ params["wo"] + params["bo"]


def init_params(key, max_seqlen, dim, hidden_dim):
    """Deterministic synthetic init (shapes match the PyTorch module)."""
    keys = jax.random.split(key, 9)

    def linear(kw, kb, fan_in, fan_out):
        bound = 1.0 / math.sqrt(fan_in)
        w = jax.random.uniform(kw, (fan_in, fan_out), jnp.float32, -bound, bound)
        b = jax.random.uniform(kb, (1, fan_out), jnp.float32, -bound, bound)
        return w, b

    wq, bq = linear(keys[0], keys[1], dim, hidden_dim)
    wk, bk = linear(keys[2], keys[3], dim, hidden_dim)
    wv, bv = linear(keys[4], keys[5], dim, hidden_dim)
    wo, bo = linear(keys[6], keys[7], hidden_dim, dim)
    xb = math.sqrt(6.0 / (max_seqlen + max_seqlen))          # xavier_uniform_
    wbias = jax.random.uniform(keys[8], (max_seqlen, max_seqlen),
                               jnp.float32, -xb, xb)
    return dict(wq=wq, bq=bq, wk=wk, bk=bk, wv=wv, bv=bv,
                wo=wo, bo=bo, wbias=wbias)


if __name__ == "__main__":
    B, T, dim, hidden_dim = 2, 8, 32, 32
    max_seqlen, s = 8, 4   # s < T so the local window mask is actually exercised

    key = jax.random.PRNGKey(0)
    kx, kp = jax.random.split(key)
    x = jax.random.normal(kx, (B, T, dim), dtype=jnp.float32)
    params = init_params(kp, max_seqlen, dim, hidden_dim)

    ref = aft_local_reference(x, params, s=s)

    # High-precision path (f32 MXU operands, exact divide): tight check.
    out_f32 = aft_local_forward(x, params, s=s, mxu_dtype=jnp.float32,
                                approx_recip=False)
    out_f32 = jax.block_until_ready(out_f32)
    assert out_f32.shape == (B, T, dim)
    assert jnp.allclose(out_f32, ref, atol=1e-4, rtol=1e-4), "f32 path mismatch"

    # Fast path (bf16 MXU operands + approx reciprocal), jitted: loose check.
    fast = jax.jit(functools.partial(aft_local_forward, s=s))
    out_fast = jax.block_until_ready(fast(x, params))
    assert out_fast.shape == (B, T, dim)
    assert jnp.allclose(out_fast, ref, atol=5e-2, rtol=5e-2), "bf16 path mismatch"

    print("KERNEL_OK")
</pallas_src>

<mosaic_0001>
module attributes {stable_mosaic.version = 11 : i64} {
  func.func @_aft_local_kernel(%arg0: i32, %arg1: i32, %arg2: i32, %arg3: memref<1xi32, #tpu.memory_space<smem>>, %arg4: memref<1x8x128xf32, #tpu.memory_space<vmem>>, %arg5: memref<1x8x256xf32, #tpu.memory_space<vmem>>, %arg6: memref<1x1x256xf32, #tpu.memory_space<vmem>>, %arg7: memref<8x8xf32, #tpu.memory_space<vmem>>, %arg8: memref<128x128xf32, #tpu.memory_space<vmem>>, %arg9: memref<1x128xf32, #tpu.memory_space<vmem>>, %arg10: memref<128x128xf32, #tpu.memory_space<vmem>>, %arg11: memref<1x128xf32, #tpu.memory_space<vmem>>, %arg12: memref<1x8x128xf32, #tpu.memory_space<vmem>>, %arg13: memref<8x256xf32, #tpu.memory_space<vmem>>) attributes {dimension_semantics = [#tpu.dimension_semantics<parallel>, #tpu.dimension_semantics<parallel>, #tpu.dimension_semantics<arbitrary>], iteration_bounds = array<i64: 2, 1, 1>, scalar_prefetch = 1 : i64, scratch_operands = 1 : i64, tpu.core_type = #tpu.core_type<tc>, window_params = [{transform_indices = @transform_0, window_bounds = array<i64: 1, 8, 128>}, {transform_indices = @transform_1, window_bounds = array<i64: 1, 8, 256>}, {transform_indices = @transform_2, window_bounds = array<i64: 1, 1, 256>}, {transform_indices = @transform_3, window_bounds = array<i64: 8, 8>}, {pipeline_mode = #tpu.pipeline_mode<synchronous>, transform_indices = @transform_4, window_bounds = array<i64: 128, 128>}, {pipeline_mode = #tpu.pipeline_mode<synchronous>, transform_indices = @transform_5, window_bounds = array<i64: 1, 128>}, {pipeline_mode = #tpu.pipeline_mode<synchronous>, transform_indices = @transform_6, window_bounds = array<i64: 128, 128>}, {pipeline_mode = #tpu.pipeline_mode<synchronous>, transform_indices = @transform_7, window_bounds = array<i64: 1, 128>}, {transform_indices = @transform_8, window_bounds = array<i64: 1, 8, 128>}]} {
    %c0_i32 = arith.constant 0 : i32
    %0 = arith.cmpi eq, %arg2, %c0_i32 : i32
    %1 = arith.extui %0 : i1 to i32
    %c0_i32_0 = arith.constant 0 : i32
    %2 = arith.cmpi ne, %1, %c0_i32_0 : i32
    scf.if %2 {
      %c0_11 = arith.constant 0 : index
      %c0_12 = arith.constant 0 : index
      %c0_13 = arith.constant 0 : index
      %13 = vector.load %arg6[%c0_11, %c0_12, %c0_13] : memref<1x1x256xf32, #tpu.memory_space<vmem>>, vector<1x1x256xf32>
      %14 = vector.shape_cast %13 : vector<1x1x256xf32> to vector<1x256xf32>
      %15 = vector.shape_cast %14 : vector<1x256xf32> to vector<1x256xf32>
      %16 = vector.broadcast %15 : vector<1x256xf32> to vector<8x256xf32>
      %c0_14 = arith.constant 0 : index
      %c0_15 = arith.constant 0 : index
      %17 = vector.load %arg13[%c0_14, %c0_15] : memref<8x256xf32, #tpu.memory_space<vmem>>, vector<8x256xf32>
      tpu.vector_store %arg13[%c0_14, %c0_15], %16 {strides = array<i32>} : memref<8x256xf32, #tpu.memory_space<vmem>>, vector<8x256xf32>,
    } else {
    }
    %c0 = arith.constant 0 : index
    %c0_1 = arith.constant 0 : index
    %3 = vector.load %arg13[%c0, %c0_1] : memref<8x256xf32, #tpu.memory_space<vmem>>, vector<8x256xf32>
    %c0_2 = arith.constant 0 : index
    %c0_3 = arith.constant 0 : index
    %4 = vector.load %arg7[%c0_2, %c0_3] : memref<8x8xf32, #tpu.memory_space<vmem>>, vector<8x8xf32>
    %c0_4 = arith.constant 0 : index
    %c0_5 = arith.constant 0 : index
    %c0_6 = arith.constant 0 : index
    %5 = vector.load %arg5[%c0_4, %c0_5, %c0_6] : memref<1x8x256xf32, #tpu.memory_space<vmem>>, vector<1x8x256xf32>
    %6 = vector.shape_cast %5 : vector<1x8x256xf32> to vector<8x256xf32>
    %cst = arith.constant dense<0.000000e+00> : vector<8x256xf32>
    %7 = tpu.matmul %4, %6, %cst {dimension_numbers = #tpu.dot_dimension_numbers<[1], [0], [0], [1], [0, 0, 1, 1], [], []>} : vector<8x8xf32>, vector<8x256xf32>, vector<8x256xf32> -> vector<8x256xf32>
    %8 = arith.addf %3, %7 : vector<8x256xf32>
    %c0_7 = arith.constant 0 : index
    %c0_8 = arith.constant 0 : index
    %9 = vector.load %arg13[%c0_7, %c0_8] : memref<8x256xf32, #tpu.memory_space<vmem>>, vector<8x256xf32>
    tpu.vector_store %arg13[%c0_7, %c0_8], %8 {strides = array<i32>} : memref<8x256xf32, #tpu.memory_space<vmem>>, vector<8x256xf32>,
    %c0_i32_9 = arith.constant 0 : i32
    %10 = arith.cmpi eq, %arg2, %c0_i32_9 : i32
    %11 = arith.extui %10 : i1 to i32
    %c0_i32_10 = arith.constant 0 : i32
    %12 = arith.cmpi ne, %11, %c0_i32_10 : i32
    scf.if %12 {
      %c0_11 = arith.constant 0 : index
      %c0_12 = arith.constant 0 : index
      %c0_13 = arith.constant 0 : index
      %13 = vector.load %arg4[%c0_11, %c0_12, %c0_13] : memref<1x8x128xf32, #tpu.memory_space<vmem>>, vector<1x8x128xf32>
      %14 = vector.shape_cast %13 : vector<1x8x128xf32> to vector<8x128xf32>
      %c0_14 = arith.constant 0 : index
      %c0_15 = arith.constant 0 : index
      %15 = vector.load %arg8[%c0_14, %c0_15] : memref<128x128xf32, #tpu.memory_space<vmem>>, vector<128x128xf32>
      %cst_16 = arith.constant dense<0.000000e+00> : vector<8x128xf32>
      %16 = tpu.matmul %14, %15, %cst_16 {dimension_numbers = #tpu.dot_dimension_numbers<[1], [0], [0], [1], [0, 0, 1, 1], [], []>} : vector<8x128xf32>, vector<128x128xf32>, vector<8x128xf32> -> vector<8x128xf32>
      %c0_17 = arith.constant 0 : index
      %c0_18 = arith.constant 0 : index
      %17 = vector.load %arg9[%c0_17, %c0_18] : memref<1x128xf32, #tpu.memory_space<vmem>>, vector<1x128xf32>
      %18 = vector.broadcast %17 : vector<1x128xf32> to vector<8x128xf32>
      %19 = arith.addf %16, %18 : vector<8x128xf32>
      %c0_19 = arith.constant 0 : index
      %c0_20 = arith.constant 0 : index
      %20 = vector.load %arg13[%c0_19, %c0_20] : memref<8x256xf32, #tpu.memory_space<vmem>>, vector<8x256xf32>
      %21 = vector.extract_strided_slice %20 {offsets = [0, 0], sizes = [8, 128], strides = [1, 1]} : vector<8x256xf32> to vector<8x128xf32>
      %22 = vector.extract_strided_slice %20 {offsets = [0, 128], sizes = [8, 128], strides = [1, 1]} : vector<8x256xf32> to vector<8x128xf32>
      %23 = arith.divf %21, %22 : vector<8x128xf32>
      %24 = arith.negf %19 : vector<8x128xf32>
      %25 = math.exp %24 : vector<8x128xf32>
      %cst_21 = arith.constant 1.000000e+00 : f32
      %26 = vector.broadcast %cst_21 : f32 to vector<8x128xf32>
      %27 = arith.addf %26, %25 : vector<8x128xf32>
      %28 = arith.divf %26, %27 : vector<8x128xf32>
      %29 = arith.mulf %28, %23 : vector<8x128xf32>
      %c0_22 = arith.constant 0 : index
      %c0_23 = arith.constant 0 : index
      %30 = vector.load %arg10[%c0_22, %c0_23] : memref<128x128xf32, #tpu.memory_space<vmem>>, vector<128x128xf32>
      %cst_24 = arith.constant dense<0.000000e+00> : vector<8x128xf32>
      %31 = tpu.matmul %29, %30, %cst_24 {dimension_numbers = #tpu.dot_dimension_numbers<[1], [0], [0], [1], [0, 0, 1, 1], [], []>} : vector<8x128xf32>, vector<128x128xf32>, vector<8x128xf32> -> vector<8x128xf32>
      %c0_25 = arith.constant 0 : index
      %c0_26 = arith.constant 0 : index
      %32 = vector.load %arg11[%c0_25, %c0_26] : memref<1x128xf32, #tpu.memory_space<vmem>>, vector<1x128xf32>
      %33 = vector.broadcast %32 : vector<1x128xf32> to vector<8x128xf32>
      %34 = arith.addf %31, %33 : vector<8x128xf32>
      %c0_27 = arith.constant 0 : index
      %c0_28 = arith.constant 0 : index
      %c0_29 = arith.constant 0 : index
      %35 = vector.load %arg12[%c0_27, %c0_28, %c0_29] : memref<1x8x128xf32, #tpu.memory_space<vmem>>, vector<1x8x128xf32>
      %36 = vector.shape_cast %35 : vector<1x8x128xf32> to vector<8x128xf32>
      %37 = vector.shape_cast %34 : vector<8x128xf32> to vector<1x8x128xf32>
      tpu.vector_store %arg12[%c0_27, %c0_28, %c0_29], %37 {strides = array<i32>} : memref<1x8x128xf32, #tpu.memory_space<vmem>>, vector<1x8x128xf32>,
    } else {
    }
    return
  }
  func.func @transform_0(%arg0: i32, %arg1: i32, %arg2: i32, %arg3: memref<1xi32, #tpu.memory_space<smem>>) -> (i32, i32, i32) {
    %c0_i32 = arith.constant 0 : i32
    %c0_i32_0 = arith.constant 0 : i32
    return %arg0, %arg1, %c0_i32 : i32, i32, i32
  }
  func.func @transform_1(%arg0: i32, %arg1: i32, %arg2: i32, %arg3: memref<1xi32, #tpu.memory_space<smem>>) -> (i32, i32, i32) {
    %0 = arith.index_cast %arg1 : i32 to index
    %1 = memref.load %arg3[%0] : memref<1xi32, #tpu.memory_space<smem>>
    %2 = arith.addi %1, %arg2 : i32
    %c0_i32 = arith.constant 0 : i32
    %c0_i32_0 = arith.constant 0 : i32
    return %arg0, %2, %c0_i32 : i32, i32, i32
  }
  func.func @transform_2(%arg0: i32, %arg1: i32, %arg2: i32, %arg3: memref<1xi32, #tpu.memory_space<smem>>) -> (i32, i32, i32) {
    %c0_i32 = arith.constant 0 : i32
    %c0_i32_0 = arith.constant 0 : i32
    %c0_i32_1 = arith.constant 0 : i32
    return %arg0, %c0_i32, %c0_i32_0 : i32, i32, i32
  }
  func.func @transform_3(%arg0: i32, %arg1: i32, %arg2: i32, %arg3: memref<1xi32, #tpu.memory_space<smem>>) -> (i32, i32) {
    %0 = arith.index_cast %arg1 : i32 to index
    %1 = memref.load %arg3[%0] : memref<1xi32, #tpu.memory_space<smem>>
    %2 = arith.addi %1, %arg2 : i32
    %c0_i32 = arith.constant 0 : i32
    return %arg1, %2 : i32, i32
  }
  func.func @transform_4(%arg0: i32, %arg1: i32, %arg2: i32, %arg3: memref<1xi32, #tpu.memory_space<smem>>) -> (i32, i32) {
    %c0_i32 = arith.constant 0 : i32
    %c0_i32_0 = arith.constant 0 : i32
    %c0_i32_1 = arith.constant 0 : i32
    return %c0_i32, %c0_i32_0 : i32, i32
  }
  func.func @transform_5(%arg0: i32, %arg1: i32, %arg2: i32, %arg3: memref<1xi32, #tpu.memory_space<smem>>) -> (i32, i32) {
    %c0_i32 = arith.constant 0 : i32
    %c0_i32_0 = arith.constant 0 : i32
    %c0_i32_1 = arith.constant 0 : i32
    return %c0_i32, %c0_i32_0 : i32, i32
  }
  func.func @transform_6(%arg0: i32, %arg1: i32, %arg2: i32, %arg3: memref<1xi32, #tpu.memory_space<smem>>) -> (i32, i32) {
    %c0_i32 = arith.constant 0 : i32
    %c0_i32_0 = arith.constant 0 : i32
    %c0_i32_1 = arith.constant 0 : i32
    return %c0_i32, %c0_i32_0 : i32, i32
  }
  func.func @transform_7(%arg0: i32, %arg1: i32, %arg2: i32, %arg3: memref<1xi32, #tpu.memory_space<smem>>) -> (i32, i32) {
    %c0_i32 = arith.constant 0 : i32
    %c0_i32_0 = arith.constant 0 : i32
    %c0_i32_1 = arith.constant 0 : i32
    return %c0_i32, %c0_i32_0 : i32, i32
  }
  func.func @transform_8(%arg0: i32, %arg1: i32, %arg2: i32, %arg3: memref<1xi32, #tpu.memory_space<smem>>) -> (i32, i32, i32) {
    %c0_i32 = arith.constant 0 : i32
    %c0_i32_0 = arith.constant 0 : i32
    return %arg0, %arg1, %c0_i32 : i32, i32, i32
  }
}

</mosaic_0001>

<llo_original>
// kernel: tpu_custom_call.1
$region0: #{tpu_custom_call.1}
  #allocation0 [shape = 'u32[]', space=smem, size = 0x4, offset = 0x4, fixed_abs, tag = 'smem constant byte address 0x4 - core index']
  #allocation1 [shape = 'u32[144,128]{1,0:T(1,128)}', space=vmem, size = 0x12000, scoped, tag = 'internal scratch']
  #allocation2 [shape = 'f32[8,256]{1,0:T(8,128)}', space=vmem, size = 0x2000, scoped, tag = 'scratch operand']
  #allocation3 [shape = 's32[1]{0}', space=sflag, size = 0x4, scoped, tag = 'scoped memory for tpu_custom_call.1']
  #allocation4 [shape = 's32[1]{0:T(128)S(6)}', space=smem, size = 0x200, scoped, tag = 'prefetched SMEM operand 0']
  %s0 = inlined_call_operand.<no memory space> [shape: s32[1], index: 0, kind: input, shape index: {}]
  %s1 = inlined_call_operand.hbm [shape: f32[2,8,128], index: 1, kind: input, shape index: {}]
  %s2 = inlined_call_operand.hbm [shape: f32[2,8,256], index: 2, kind: input, shape index: {}]
  %s3 = inlined_call_operand.vmem [shape: f32[2,1,256], index: 3, kind: input, shape index: {}]
  %s4 = inlined_call_operand.hbm [shape: f32[8,8], index: 4, kind: input, shape index: {}]
  %s5 = inlined_call_operand.hbm [shape: f32[128,128], index: 5, kind: input, shape index: {}]
  %s6 = inlined_call_operand.vmem [shape: f32[1,128], index: 6, kind: input, shape index: {}]
  %s7 = inlined_call_operand.hbm [shape: f32[128,128], index: 7, kind: input, shape index: {}]
  %s8 = inlined_call_operand.vmem [shape: f32[1,128], index: 8, kind: input, shape index: {}]
  %s9 = inlined_call_operand.hbm [shape: f32[2,8,128], index: 9, kind: output, shape index: {}]
  %s10 = sld [smem:[#allocation0]]
  $region93: #{tpu_custom_call.1} parent=0
    _
  %s12 = ssub.s32 1, %s10
  %s13 = scalar_select 0, %s12, %s10
  %14 = sst [smem:[#allocation4]] %s0
  $region1: #{tpu_custom_call.1} parent=0
    #allocation5 [shape = 'u8[8192]{0}', space=vmem, size = 0x2000, scoped, tag = 'input window, operand 1']
    #allocation6 [shape = 's32[2]{0}', space=sflag, size = 0x8, scoped, tag = 'scoped memory for tpu_custom_call.1']
    #allocation7 [shape = 's32[2]{0}', space=sflag, size = 0x8, scoped, tag = 'scoped memory for tpu_custom_call.1']
    #allocation8 [shape = 'u8[16384]{0}', space=vmem, size = 0x4000, scoped, tag = 'input window, operand 2']
    #allocation9 [shape = 's32[2]{0}', space=sflag, size = 0x8, scoped, tag = 'scoped memory for tpu_custom_call.1']
    #allocation10 [shape = 'u8[4096]{0}', space=vmem, size = 0x1000, scoped, tag = 'input window, operand 4, single buffered']
    #allocation11 [shape = 'u8[65536]{0}', space=vmem, size = 0x10000, scoped, tag = 'input window, operand 5, single buffered']
    #allocation12 [shape = 's32[1]{0}', space=sflag, size = 0x4, scoped, tag = 'scoped memory for tpu_custom_call.1']
    #allocation13 [shape = 'u8[65536]{0}', space=vmem, size = 0x10000, scoped, tag = 'input window, operand 7, single buffered']
    #allocation14 [shape = 'u8[8192]{0}', space=vmem, size = 0x2000, scoped, tag = 'output window, operand 0']
    %15 = vsyncpa [#allocation6], 0
    %s16 = scalar_lea.sflag [#allocation6], 1
    %17 = vsyncpa %s16, 0
    %18 = vsyncpa [#allocation9], 0
    %s19 = scalar_lea.sflag [#allocation9], 1
    %20 = vsyncpa %s19, 0
    %21 = vsyncpa [#allocation12], 0
    %22 = vsyncpa [#allocation7], 0
    %s23 = scalar_lea.sflag [#allocation7], 1
    %24 = vsyncpa %s23, 0
    loop: start=0, step=1, limit=4
    $region2: #{tpu_custom_call.1} parent=1 // loop_pre_header
      _
    $region3: #{tpu_custom_call.1} parent=1 // loop_header
      %s26 = sphi 0, %s30
      %p27 = scmp.ge.s32.totalorder %s26, 4
      %s33 = sphi 0, %s52
      %s34 = sphi 0, %s48
      %s35 = sphi 0, %s44
      %s36 = sphi 0, %s33
      %s37 = sphi 0, %s34
      %s38 = sphi 0, %s35
      %s39 = sphi 0, %s36
      %s40 = sphi 0, %s37
      %s41 = sphi 0, %s38
      %s57 = sphi 0, %s59
      %s60 = sphi 0, %s57
      %s61 = sphi 0, %s60
      %s77 = sphi 0, %s61
      %s89 = sphi 0, %s91
      %s92 = sphi 0, %s89
      %s93 = sphi 0, %s92
      %s109 = sphi 0, %s93
      %s115 = sphi 0, %s117
      %s118 = sphi 0, %s115
      %s119 = sphi 0, %s118
      %s135 = sphi 0, %s119
      %s147 = sphi 0, %s149
      %s150 = sphi 0, %s147
      %s151 = sphi 0, %s150
      %s167 = sphi 0, %s151
      %s171 = sphi 0, %s171
      %s173 = sphi 0, %s171
      %s174 = sphi 0, %s173
      %s188 = sphi 0, %s174
      %s192 = sphi 0, %s192
      %s194 = sphi 0, %s192
      %s195 = sphi 0, %s194
      %s209 = sphi 0, %s195
      %s213 = sphi 0, %s213
      %s215 = sphi 0, %s213
      %s216 = sphi 0, %s215
      %s230 = sphi 0, %s216
      %s234 = sphi 0, %s234
      %s236 = sphi 0, %s234
      %s237 = sphi 0, %s236
      %s251 = sphi 0, %s237
      %s259 = sphi 0, %s261
      %s262 = sphi 0, %s259
      %s263 = sphi 0, %s262
      %s279 = sphi 0, %s263
    $region4: #{tpu_custom_call.1} parent=1 // loop_header_branch
      %29 = sbr.rel (%p27) target = $region8
    $region5: #{tpu_custom_call.1} parent=1 // loop_body
      %s31 = ssub.s32 %s26, 1
      %s32 = ssub.s32 %s26, 2
      %s42 = sadd.s32 1, %s35
      %p43 = scmp.ge.s32.totalorder %s42, 1
      %s44 = scalar_select %p43, 0, %s42
      %s45 = sadd.s32 1, %s34
      %s46 = scalar_select %p43, %s45, %s34
      %p47 = scmp.ge.s32.totalorder %s46, 1
      %s48 = scalar_select %p47, 0, %s46
      %s49 = sadd.s32 1, %s33
      %s50 = scalar_select %p47, %s49, %s33
      %p51 = scmp.ge.s32.totalorder %s50, 2
      %s52 = scalar_select %p51, 0, %s50
      %s53 = ssub.s32 %s33, %s52
      %s54 = ssub.s32 %s34, %s48
      %s55 = sor.u32 %s53, %s54
      %p56 = scmp.eq.s32.totalorder %s55, 0
      %s58 = sadd.s32 %s57, 1
      %s59 = scalar_select %p56, %s57, %s58
      %p62 = pneg %p56
      %p63 = scmp.eq.s32.totalorder %s26, 1
      %p64 = por %p62, %p63
      %p65 = scmp.ne.s32.totalorder %s57, %s60
      %p66 = scmp.eq.s32.totalorder %s26, 0
      %p67 = por %p65, %p66
      %p68 = scmp.ne.s32.totalorder %s57, %s60
      %p69 = scmp.eq.s32.totalorder %s31, 1
      %p70 = por %p68, %p69
      %p71 = scmp.ne.s32.totalorder %s60, %s61
      %p72 = scmp.eq.s32.totalorder %s31, 0
      %p73 = por %p71, %p72
      %p74 = scmp.ne.s32.totalorder %s60, %s61
      %p75 = scmp.eq.s32.totalorder %s32, 1
      %p76 = por %p74, %p75
      %p78 = scmp.ne.s32.totalorder %s61, %s77
      %p79 = scmp.eq.s32.totalorder %s32, 0
      %p80 = por %p78, %p79
      %s81 = sld [smem:[#allocation4 + %s34]]
      %s82 = sadd.s32 %s81, %s35
      %s83 = sld [smem:[#allocation4 + %s48]]
      %s84 = sadd.s32 %s83, %s44
      %s85 = ssub.s32 %s33, %s52
      %s86 = ssub.s32 %s82, %s84
      %s87 = sor.u32 %s85, %s86
      %p88 = scmp.eq.s32.totalorder %s87, 0
      %s90 = sadd.s32 %s89, 1
      %s91 = scalar_select %p88, %s89, %s90
      %p94 = pneg %p88
      %p95 = scmp.eq.s32.totalorder %s26, 1
      %p96 = por %p94, %p95
      %p97 = scmp.ne.s32.totalorder %s89, %s92
      %p98 = scmp.eq.s32.totalorder %s26, 0
      %p99 = por %p97, %p98
      %p100 = scmp.ne.s32.totalorder %s89, %s92
      %p101 = scmp.eq.s32.totalorder %s31, 1
      %p102 = por %p100, %p101
      %p103 = scmp.ne.s32.totalorder %s92, %s93
      %p104 = scmp.eq.s32.totalorder %s31, 0
      %p105 = por %p103, %p104
      %p106 = scmp.ne.s32.totalorder %s92, %s93
      %p107 = scmp.eq.s32.totalorder %s32, 1
      %p108 = por %p106, %p107
      %p110 = scmp.ne.s32.totalorder %s93, %s109
      %p111 = scmp.eq.s32.totalorder %s32, 0
      %p112 = por %p110, %p111
      %s113 = ssub.s32 %s33, %s52
      %p114 = scmp.eq.s32.totalorder %s113, 0
      %s116 = sadd.s32 %s115, 1
      %s117 = scalar_select %p114, %s115, %s116
      %p120 = pneg %p114
      %p121 = scmp.eq.s32.totalorder %s26, 1
      %p122 = por %p120, %p121
      %p123 = scmp.ne.s32.totalorder %s115, %s118
      %p124 = scmp.eq.s32.totalorder %s26, 0
      %p125 = por %p123, %p124
      %p126 = scmp.ne.s32.totalorder %s115, %s118
      %p127 = scmp.eq.s32.totalorder %s31, 1
      %p128 = por %p126, %p127
      %p129 = scmp.ne.s32.totalorder %s118, %s119
      %p130 = scmp.eq.s32.totalorder %s31, 0
      %p131 = por %p129, %p130
      %p132 = scmp.ne.s32.totalorder %s118, %s119
      %p133 = scmp.eq.s32.totalorder %s32, 1
      %p134 = por %p132, %p133
      %p136 = scmp.ne.s32.totalorder %s119, %s135
      %p137 = scmp.eq.s32.totalorder %s32, 0
      %p138 = por %p136, %p137
      %s139 = sld [smem:[#allocation4 + %s34]]
      %s140 = sadd.s32 %s139, %s35
      %s141 = sld [smem:[#allocation4 + %s48]]
      %s142 = sadd.s32 %s141, %s44
      %s143 = ssub.s32 %s34, %s48
      %s144 = ssub.s32 %s140, %s142
      %s145 = sor.u32 %s143, %s144
      %p146 = scmp.eq.s32.totalorder %s145, 0
      %s148 = sadd.s32 %s147, 1
      %s149 = scalar_select %p146, %s147, %s148
      %p152 = pneg %p146
      %p153 = scmp.eq.s32.totalorder %s26, 1
      %p154 = por %p152, %p153
      %p155 = scmp.ne.s32.totalorder %s147, %s150
      %p156 = scmp.eq.s32.totalorder %s26, 0
      %p157 = por %p155, %p156
      %p158 = scmp.ne.s32.totalorder %s147, %s150
      %p159 = scmp.eq.s32.totalorder %s31, 1
      %p160 = por %p158, %p159
      %p161 = scmp.ne.s32.totalorder %s150, %s151
      %p162 = scmp.eq.s32.totalorder %s31, 0
      %p163 = por %p161, %p162
      %p164 = scmp.ne.s32.totalorder %s150, %s151
      %p165 = scmp.eq.s32.totalorder %s32, 1
      %p166 = por %p164, %p165
      %p168 = scmp.ne.s32.totalorder %s151, %s167
      %p169 = scmp.eq.s32.totalorder %s32, 0
      %p170 = por %p168, %p169
      %s172 = sadd.s32 %s171, 1
      %p175 = scmp.eq.s32.totalorder %s26, 1
      %p176 = scmp.ne.s32.totalorder %s171, %s173
      %p177 = scmp.eq.s32.totalorder %s26, 0
      %p178 = por %p176, %p177
      %p179 = scmp.ne.s32.totalorder %s171, %s173
      %p180 = scmp.eq.s32.totalorder %s31, 1
      %p181 = por %p179, %p180
      %p182 = scmp.ne.s32.totalorder %s173, %s174
      %p183 = scmp.eq.s32.totalorder %s31, 0
      %p184 = por %p182, %p183
      %p185 = scmp.ne.s32.totalorder %s173, %s174
      %p186 = scmp.eq.s32.totalorder %s32, 1
      %p187 = por %p185, %p186
      %p189 = scmp.ne.s32.totalorder %s174, %s188
      %p190 = scmp.eq.s32.totalorder %s32, 0
      %p191 = por %p189, %p190
      %s193 = sadd.s32 %s192, 1
      %p196 = scmp.eq.s32.totalorder %s26, 1
      %p197 = scmp.ne.s32.totalorder %s192, %s194
      %p198 = scmp.eq.s32.totalorder %s26, 0
      %p199 = por %p197, %p198
      %p200 = scmp.ne.s32.totalorder %s192, %s194
      %p201 = scmp.eq.s32.totalorder %s31, 1
      %p202 = por %p200, %p201
      %p203 = scmp.ne.s32.totalorder %s194, %s195
      %p204 = scmp.eq.s32.totalorder %s31, 0
      %p205 = por %p203, %p204
      %p206 = scmp.ne.s32.totalorder %s194, %s195
      %p207 = scmp.eq.s32.totalorder %s32, 1
      %p208 = por %p206, %p207
      %p210 = scmp.ne.s32.totalorder %s195, %s209
      %p211 = scmp.eq.s32.totalorder %s32, 0
      %p212 = por %p210, %p211
      %s214 = sadd.s32 %s213, 1
      %p217 = scmp.eq.s32.totalorder %s26, 1
      %p218 = scmp.ne.s32.totalorder %s213, %s215
      %p219 = scmp.eq.s32.totalorder %s26, 0
      %p220 = por %p218, %p219
      %p221 = scmp.ne.s32.totalorder %s213, %s215
      %p222 = scmp.eq.s32.totalorder %s31, 1
      %p223 = por %p221, %p222
      %p224 = scmp.ne.s32.totalorder %s215, %s216
      %p225 = scmp.eq.s32.totalorder %s31, 0
      %p226 = por %p224, %p225
      %p227 = scmp.ne.s32.totalorder %s215, %s216
      %p228 = scmp.eq.s32.totalorder %s32, 1
      %p229 = por %p227, %p228
      %p231 = scmp.ne.s32.totalorder %s216, %s230
      %p232 = scmp.eq.s32.totalorder %s32, 0
      %p233 = por %p231, %p232
      %s235 = sadd.s32 %s234, 1
      %p238 = scmp.eq.s32.totalorder %s26, 1
      %p239 = scmp.ne.s32.totalorder %s234, %s236
      %p240 = scmp.eq.s32.totalorder %s26, 0
      %p241 = por %p239, %p240
      %p242 = scmp.ne.s32.totalorder %s234, %s236
      %p243 = scmp.eq.s32.totalorder %s31, 1
      %p244 = por %p242, %p243
      %p245 = scmp.ne.s32.totalorder %s236, %s237
      %p246 = scmp.eq.s32.totalorder %s31, 0
      %p247 = por %p245, %p246
      %p248 = scmp.ne.s32.totalorder %s236, %s237
      %p249 = scmp.eq.s32.totalorder %s32, 1
      %p250 = por %p248, %p249
      %p252 = scmp.ne.s32.totalorder %s237, %s251
      %p253 = scmp.eq.s32.totalorder %s32, 0
      %p254 = por %p252, %p253
      %s255 = ssub.s32 %s33, %s52
      %s256 = ssub.s32 %s34, %s48
      %s257 = sor.u32 %s255, %s256
      %p258 = scmp.eq.s32.totalorder %s257, 0
      %s260 = sadd.s32 %s259, 1
      %s261 = scalar_select %p258, %s259, %s260
      %p264 = pneg %p258
      %p265 = scmp.eq.s32.totalorder %s26, 1
      %p266 = por %p264, %p265
      %p267 = scmp.ne.s32.totalorder %s259, %s262
      %p268 = scmp.eq.s32.totalorder %s26, 0
      %p269 = por %p267, %p268
      %p270 = scmp.ne.s32.totalorder %s259, %s262
      %p271 = scmp.eq.s32.totalorder %s31, 1
      %p272 = por %p270, %p271
      %p273 = scmp.ne.s32.totalorder %s262, %s263
      %p274 = scmp.eq.s32.totalorder %s31, 0
      %p275 = por %p273, %p274
      %p276 = scmp.ne.s32.totalorder %s262, %s263
      %p277 = scmp.eq.s32.totalorder %s32, 1
      %p278 = por %p276, %p277
      %p280 = scmp.ne.s32.totalorder %s263, %s279
      %p281 = scmp.eq.s32.totalorder %s32, 0
      %p282 = por %p280, %p281
      %p283 = scmp.le.s32.totalorder 1, %s26
      %p284 = scmp.lt.s32.totalorder %s26, 3
      %p285 = pnand %p283, %p284
      %p286 = pneg %p285
      // Predicated region
      $region9: #{tpu_custom_call.1} parent=5 // pred_check
        _
      $region10: #{tpu_custom_call.1} parent=5 // pred_check_branch
        %288 = sbr.rel (%p285) target = $region12
      $region11: #{tpu_custom_call.1} parent=5 // pred_region
        %s289 = ssub.s32 %s26, 1
        // Predicated region
        $region13: #{tpu_custom_call.1} parent=11 // pred_check
          %p290 = pneg %p163
        $region14: #{tpu_custom_call.1} parent=11 // pred_check_branch
          %292 = sbr.rel (%p290) target = $region16
        $region15: #{tpu_custom_call.1} parent=11 // pred_region
          %s293 = sld [smem:[#allocation4 + %s37]]
          %s294 = sadd.s32 %s293, %s38
          %s296 = ssub.s32 128, 128
          %297 = vsyncadd [#allocation9], %s296
          %s298 = sadd.s32 %s294, %s37
          %s299 = smul.addr %s298, 128
          %s300 = scalar_lea.hbm %s4, %s299
          %s302 = sshll.u32 [#allocation10], 4
          %s303 = int_to_ptr.vmem [resolvable:$true] %s302
          %305 = dma.hbm_to_vmem [thread:$0]  %s300, 128, %s303, [#allocation9]
        $region16: #{tpu_custom_call.1} parent=11 // pred_fallthru
          _
        // Predicated region
        $region17: #{tpu_custom_call.1} parent=11 // pred_check
          %p306 = pneg %p184
        $region18: #{tpu_custom_call.1} parent=11 // pred_check_branch
          %308 = sbr.rel (%p306) target = $region20
        $region19: #{tpu_custom_call.1} parent=11 // pred_region
          %s310 = ssub.s32 2048, 2048
          %311 = vsyncadd [#allocation12], %s310
          %s312 = sshll.u32 [#allocation11], 4
          %s313 = int_to_ptr.vmem [resolvable:$true] %s312
          %318 = dma.hbm_to_vmem [thread:$0]  %s5, 2048, %s313, [#allocation12], 128, 128, 8
        $region20: #{tpu_custom_call.1} parent=11 // pred_fallthru
          _
        // Predicated region
        $region21: #{tpu_custom_call.1} parent=11 // pred_check
          %p319 = pneg %p205
        $region22: #{tpu_custom_call.1} parent=11 // pred_check_branch
          %321 = sbr.rel (%p319) target = $region24
        $region23: #{tpu_custom_call.1} parent=11 // pred_region
          _
        $region24: #{tpu_custom_call.1} parent=11 // pred_fallthru
          _
        // Predicated region
        $region25: #{tpu_custom_call.1} parent=11 // pred_check
          %p322 = pneg %p226
        $region26: #{tpu_custom_call.1} parent=11 // pred_check_branch
          %324 = sbr.rel (%p322) target = $region28
        $region27: #{tpu_custom_call.1} parent=11 // pred_region
          %s326 = ssub.s32 2048, 2048
          %327 = vsyncadd [#allocation12], %s326
          %s328 = sshll.u32 [#allocation13], 4
          %s329 = int_to_ptr.vmem [resolvable:$true] %s328
          %334 = dma.hbm_to_vmem [thread:$0]  %s7, 2048, %s329, [#allocation12], 128, 128, 8
        $region28: #{tpu_custom_call.1} parent=11 // pred_fallthru
          _
        // Predicated region
        $region29: #{tpu_custom_call.1} parent=11 // pred_check
          %p335 = pneg %p247
        $region30: #{tpu_custom_call.1} parent=11 // pred_check_branch
          %337 = sbr.rel (%p335) target = $region32
        $region31: #{tpu_custom_call.1} parent=11 // pred_region
          _
        $region32: #{tpu_custom_call.1} parent=11 // pred_fallthru
          _
      $region12: #{tpu_custom_call.1} parent=5 // pred_fallthru
        _
      %p338 = scmp.lt.s32.totalorder %s26, 2
      // Predicated region
      $region33: #{tpu_custom_call.1} parent=5 // pred_check
        %p339 = pneg %p338
      $region34: #{tpu_custom_call.1} parent=5 // pred_check_branch
        %341 = sbr.rel (%p339) target = $region36
      $region35: #{tpu_custom_call.1} parent=5 // pred_region
        // Predicated region
        $region37: #{tpu_custom_call.1} parent=35 // pred_check
          %p342 = pneg %p67
        $region38: #{tpu_custom_call.1} parent=35 // pred_check_branch
          %344 = sbr.rel (%p342) target = $region40
        $region39: #{tpu_custom_call.1} parent=35 // pred_region
          %s345 = sand.u32 %s57, 1
          %s346 = scalar_lea.sflag [#allocation6], %s345
          %s347 = sand.u32 %s57, 1
          %s348 = smul.addr %s347, 8
          %s349 = scalar_lea.vmem [#allocation5], %s348
          %s351 = ssub.s32 128, 128
          %352 = vsyncadd %s346, %s351
          %s353 = sadd.s32 %s34, %s33
          %s354 = smul.addr %s353, 128
          %s355 = scalar_lea.hbm %s1, %s354
          %s357 = sshll.u32 %s349, 4
          %s358 = int_to_ptr.vmem [resolvable:$true] %s357
          %360 = dma.hbm_to_vmem [thread:$0]  %s355, 128, %s358, %s346
        $region40: #{tpu_custom_call.1} parent=35 // pred_fallthru
          _
        // Predicated region
        $region41: #{tpu_custom_call.1} parent=35 // pred_check
          %p361 = pneg %p99
        $region42: #{tpu_custom_call.1} parent=35 // pred_check_branch
          %363 = sbr.rel (%p361) target = $region44
        $region43: #{tpu_custom_call.1} parent=35 // pred_region
          %s364 = sand.u32 %s26, 1
          %s365 = scalar_lea.sflag [#allocation9], %s364
          %s366 = sand.u32 %s89, 1
          %s367 = smul.addr %s366, 16
          %s368 = scalar_lea.vmem [#allocation8], %s367
          %s369 = sld [smem:[#allocation4 + %s34]]
          %s370 = sadd.s32 %s369, %s35
          %s372 = ssub.s32 256, 256
          %373 = vsyncadd %s365, %s372
          %s374 = smul.addr %s370, 2
          %s375 = smul.addr %s33, 2
          %s376 = sadd.s32 %s374, %s375
          %s377 = smul.addr %s376, 128
          %s378 = scalar_lea.hbm %s2, %s377
          %s380 = sshll.u32 %s368, 4
          %s381 = int_to_ptr.vmem [resolvable:$true] %s380
          %383 = dma.hbm_to_vmem [thread:$0]  %s378, 256, %s381, %s365
        $region44: #{tpu_custom_call.1} parent=35 // pred_fallthru
          _
        // Predicated region
        $region45: #{tpu_custom_call.1} parent=35 // pred_check
          %p384 = pneg %p125
        $region46: #{tpu_custom_call.1} parent=35 // pred_check_branch
          %386 = sbr.rel (%p384) target = $region48
        $region47: #{tpu_custom_call.1} parent=35 // pred_region
          %p387 = scmp.lt.s32.totalorder %s33, 1
          %s388 = scalar_select %p387, %s33, 1
          %s389 = smul.addr %s388, 2
          %s390 = scalar_lea.vmem %s3, %s389
        $region48: #{tpu_custom_call.1} parent=35 // pred_fallthru
          _
      $region36: #{tpu_custom_call.1} parent=5 // pred_fallthru
        _
      %p391 = scmp.le.s32.totalorder 1, %s26
      %p392 = scmp.lt.s32.totalorder %s26, 3
      %p393 = pnand %p391, %p392
      %p394 = pneg %p393
      // Predicated region
      $region49: #{tpu_custom_call.1} parent=5 // pred_check
        _
      $region50: #{tpu_custom_call.1} parent=5 // pred_check_branch
        %396 = sbr.rel (%p393) target = $region52
      $region51: #{tpu_custom_call.1} parent=5 // pred_region
        %s397 = ssub.s32 %s26, 1
        %s398 = sand.u32 %s60, 1
        %s399 = scalar_lea.sflag [#allocation6], %s398
        %s400 = sand.u32 %s60, 1
        %s401 = smul.addr %s400, 8
        %s402 = scalar_lea.vmem [#allocation5], %s401
        // Predicated region
        $region53: #{tpu_custom_call.1} parent=51 // pred_check
          %p403 = pneg %p73
        $region54: #{tpu_custom_call.1} parent=51 // pred_check_branch
          %405 = sbr.rel (%p403) target = $region56
        $region55: #{tpu_custom_call.1} parent=51 // pred_region
          %406 = dma.done %s399, 128
        $region56: #{tpu_custom_call.1} parent=51 // pred_fallthru
          _
        %s407 = sand.u32 %s31, 1
        %s408 = scalar_lea.sflag [#allocation9], %s407
        %s409 = sand.u32 %s92, 1
        %s410 = smul.addr %s409, 16
        %s411 = scalar_lea.vmem [#allocation8], %s410
        // Predicated region
        $region57: #{tpu_custom_call.1} parent=51 // pred_check
          %p412 = pneg %p105
        $region58: #{tpu_custom_call.1} parent=51 // pred_check_branch
          %414 = sbr.rel (%p412) target = $region60
        $region59: #{tpu_custom_call.1} parent=51 // pred_region
          %415 = dma.done %s408, 256
        $region60: #{tpu_custom_call.1} parent=51 // pred_fallthru
          _
        // Predicated region
        $region61: #{tpu_custom_call.1} parent=51 // pred_check
          %p416 = pneg %p163
        $region62: #{tpu_custom_call.1} parent=51 // pred_check_branch
          %418 = sbr.rel (%p416) target = $region64
        $region63: #{tpu_custom_call.1} parent=51 // pred_region
          %419 = dma.done [#allocation9], 128
        $region64: #{tpu_custom_call.1} parent=51 // pred_fallthru
          _
        // Predicated region
        $region65: #{tpu_custom_call.1} parent=51 // pred_check
          %p420 = pneg %p184
        $region66: #{tpu_custom_call.1} parent=51 // pred_check_branch
          %422 = sbr.rel (%p420) target = $region68
        $region67: #{tpu_custom_call.1} parent=51 // pred_region
          %423 = dma.done [#allocation12], 2048
        $region68: #{tpu_custom_call.1} parent=51 // pred_fallthru
          _
        // Predicated region
        $region69: #{tpu_custom_call.1} parent=51 // pred_check
          %p424 = pneg %p226
        $region70: #{tpu_custom_call.1} parent=51 // pred_check_branch
          %426 = sbr.rel (%p424) target = $region72
        $region71: #{tpu_custom_call.1} parent=51 // pred_region
          %427 = dma.done [#allocation12], 2048
        $region72: #{tpu_custom_call.1} parent=51 // pred_fallthru
          _
        %s428 = sand.u32 %s60, 1
        %s429 = scalar_lea.sflag [#allocation6], %s428
        %s430 = sand.u32 %s60, 1
        %s431 = smul.addr %s430, 8
        %s432 = scalar_lea.vmem [#allocation5], %s431
        %p433 = pneg %p73
        %p434 = pneg %p70
        %s435 = sand.u32 %s31, 1
        %s436 = scalar_lea.sflag [#allocation9], %s435
        %s437 = sand.u32 %s92, 1
        %s438 = smul.addr %s437, 16
        %s439 = scalar_lea.vmem [#allocation8], %s438
        %p440 = pneg %p105
        %p441 = pneg %p102
        %p442 = scmp.lt.s32.totalorder %s36, 1
        %s443 = scalar_select %p442, %s36, 1
        %s444 = smul.addr %s443, 2
        %s445 = scalar_lea.vmem %s3, %s444
        %p446 = pneg %p131
        %p447 = pneg %p128
        %p448 = pneg %p163
        %p449 = pneg %p160
        %p450 = pneg %p184
        %p451 = pneg %p181
        %p452 = pneg %p205
        %p453 = pneg %p202
        %p454 = pneg %p226
        %p455 = pneg %p223
        %p456 = pneg %p247
        %p457 = pneg %p244
        %p458 = pneg %p275
        %p459 = pneg %p272
        %s460 = sand.u32 %s262, 1
        %s461 = scalar_lea.sflag [#allocation7], %s460
        %s462 = sand.u32 %s262, 1
        %s463 = smul.addr %s462, 8
        %s464 = scalar_lea.vmem [#allocation14], %s463
        %s465 = sld [smem:[#allocation4 + %s37]]
        %s466 = sadd.s32 %s465, %s38
        %p467 = scmp.lt.s32.totalorder %s36, 1
        %s468 = scalar_select %p467, %s36, 1
        %s469 = smul.addr %s468, 2
        %s470 = scalar_lea.vmem %s3, %s469
        %s471 = sld [smem:[#allocation4 + %s37]]
        %s472 = sadd.s32 %s471, %s38
        %p473 = scmp.eq.s32.totalorder %s38, 0
        // Predicated region
        $region73: #{tpu_custom_call.1} parent=51 // pred_check
          %p474 = pneg %p473
        $region74: #{tpu_custom_call.1} parent=51 // pred_check_branch
          %476 = sbr.rel (%p474) target = $region76
        $region75: #{tpu_custom_call.1} parent=51 // pred_region
          %v477 = vld [vmem:[%s470] sm:$0x3]
          %v479 = vlaneseq
          %v480 = vshrl.u32 %v479, 7
          %v481 = vsub.s32 0, %v480
          %v482 = vrot.slane %v477, %v481
          %v483 = vlaneseq
          %v484 = vshrl.u32 %v483, 7
          %v485 = vsub.s32 1, %v484
          %v486 = vrot.slane %v477, %v485
          %489 = vst [vmem:[#allocation2] sm:$0xff] %v482
          %490 = vst [vmem:[#allocation2 + $0x8] sm:$0xff] %v486
        $region76: #{tpu_custom_call.1} parent=51 // pred_fallthru
          _
        %v491 = vld [vmem:[#allocation2] sm:$0xff]
        %v492 = vld [vmem:[#allocation2 + $0x8] sm:$0xff]
        %v493 = vld [vmem:[#allocation10] sm:$0xff]
        %v494 = vld [vmem:[%s411] sm:$0xff]
        %v495 = vld [vmem:[%s411 + $0x8] sm:$0xff]
        %vm496 = vcmask 64512
        %v498 = vsel %vm496, %v493, 0
        %500 = vmatprep.subr.mxu0 0.0
        %501 = vmatpush1.msra.mxu0 0.0
        %502 = vmatprep.subr.mxu0 0.0
        %503 = vmatpush1.msra.mxu0 0.0
        %504 = vmatprep.subr.mxu0 0.0
        %505 = vmatpush1.msra.mxu0 0.0
        %506 = vmatprep.subr.mxu0 0.0
        %507 = vmatpush1.msra.mxu0 0.0
        %508 = vmatprep.subr.mxu0 0.0
        %509 = vmatpush1.msra.mxu0 0.0
        %510 = vmatprep.subr.mxu0 0.0
        %511 = vmatpush1.msra.mxu0 0.0
        %512 = vmatprep.subr.mxu0 0.0
        %513 = vmatpush1.msra.mxu0 0.0
        %514 = vmatprep.subr.mxu0 0.0
        %515 = vmatpush1.msra.mxu0 0.0
        %516 = vmatprep.subr.mxu0 0.0
        %517 = vmatpush1.msra.mxu0 0.0
        %518 = vmatprep.subr.mxu0 0.0
        %519 = vmatpush1.msra.mxu0 0.0
        %520 = vmatprep.subr.mxu0 0.0
        %521 = vmatpush1.msra.mxu0 0.0
        %522 = vmatprep.subr.mxu0 0.0
        %523 = vmatpush1.msra.mxu0 0.0
        %524 = vmatprep.subr.mxu0 0.0
        %525 = vmatpush1.msra.mxu0 0.0
        %526 = vmatprep.subr.mxu0 0.0
        %527 = vmatpush1.msra.mxu0 0.0
        %528 = vmatprep.subr.mxu0 0.0
        %529 = vmatpush1.msra.mxu0 0.0
        %530 = vmatprep.subr.mxu0 %v495
        %531 = vmatpush1.msra.mxu0 %v494
        %532 = vmatprep.subr.mxu0 0.0
        %533 = vmatpush2.msra.mxu0 0.0
        %534 = vmatprep.subr.mxu0 0.0
        %535 = vmatpush2.msra.mxu0 0.0
        %536 = vmatprep.subr.mxu0 0.0
        %537 = vmatpush2.msra.mxu0 0.0
        %538 = vmatprep.subr.mxu0 0.0
        %539 = vmatpush2.msra.mxu0 0.0
        %540 = vmatprep.subr.mxu0 0.0
        %541 = vmatpush2.msra.mxu0 0.0
        %542 = vmatprep.subr.mxu0 0.0
        %543 = vmatpush2.msra.mxu0 0.0
        %544 = vmatprep.subr.mxu0 0.0
        %545 = vmatpush2.msra.mxu0 0.0
        %546 = vmatprep.subr.mxu0 0.0
        %547 = vmatpush2.msra.mxu0 0.0
        %548 = vmatprep.subr.mxu0 0.0
        %549 = vmatpush2.msra.mxu0 0.0
        %550 = vmatprep.subr.mxu0 0.0
        %551 = vmatpush2.msra.mxu0 0.0
        %552 = vmatprep.subr.mxu0 0.0
        %553 = vmatpush2.msra.mxu0 0.0
        %554 = vmatprep.subr.mxu0 0.0
        %555 = vmatpush2.msra.mxu0 0.0
        %556 = vmatprep.subr.mxu0 0.0
        %557 = vmatpush2.msra.mxu0 0.0
        %558 = vmatprep.subr.mxu0 0.0
        %559 = vmatpush2.msra.mxu0 0.0
        %560 = vmatprep.subr.mxu0 0.0
        %561 = vmatpush2.msra.mxu0 0.0
        %562 = vmatprep.subr.mxu0 0.0
        %563 = vmatpush2.msra.mxu0 0.0
        %564 = vmatprep.mubr.f32.mxu0 0.0
        %565 = vmatmul.mubr.f32.gmra.mxu0 %v498
        %v566 = vpop.f32.mrf.mxu0
        %v567 = vadd.f32 0.0, %v566
        %v568 = vpop.f32.mrf.mxu0
        %v569 = vadd.f32 0.0, %v568
        %570 = vdwg.mxu0
        %v571 = vadd.f32 %v491, %v567
        %v572 = vadd.f32 %v492, %v569
        %573 = vst [vmem:[#allocation2] sm:$0xff] %v571
        %574 = vst [vmem:[#allocation2 + $0x8] sm:$0xff] %v572
        // Predicated region
        $region77: #{tpu_custom_call.1} parent=51 // pred_check
          %p575 = pneg %p473
        $region78: #{tpu_custom_call.1} parent=51 // pred_check_branch
          %577 = sbr.rel (%p575) target = $region80
        $region79: #{tpu_custom_call.1} parent=51 // pred_region
          %v578 = vld [vmem:[%s402] sm:$0xff]
          %v579 = vld [vmem:[#allocation11] sm:$0xff]
          %v580 = vld [vmem:[#allocation11 + $0x8] sm:$0xff]
          %v581 = vld [vmem:[#allocation11 + $0x10] sm:$0xff]
          %v582 = vld [vmem:[#allocation11 + $0x18] sm:$0xff]
          %v583 = vld [vmem:[#allocation11 + $0x20] sm:$0xff]
          %v584 = vld [vmem:[#allocation11 + $0x28] sm:$0xff]
          %v585 = vld [vmem:[#allocation11 + $0x30] sm:$0xff]
          %v586 = vld [vmem:[#allocation11 + $0x38] sm:$0xff]
          %v587 = vld [vmem:[#allocation11 + $0x40] sm:$0xff]
          %v588 = vld [vmem:[#allocation11 + $0x48] sm:$0xff]
          %v589 = vld [vmem:[#allocation11 + $0x50] sm:$0xff]
          %v590 = vld [vmem:[#allocation11 + $0x58] sm:$0xff]
          %v591 = vld [vmem:[#allocation11 + $0x60] sm:$0xff]
          %v592 = vld [vmem:[#allocation11 + $0x68] sm:$0xff]
          %v593 = vld [vmem:[#allocation11 + $0x70] sm:$0xff]
          %v594 = vld [vmem:[#allocation11 + $0x78] sm:$0xff]
          %v595 = vld [vmem:[%s6] sm:$0x1]
          %v597 = vlaneseq
          %v598 = vshrl.u32 %v597, 7
          %v599 = vsub.s32 0, %v598
          %v600 = vrot.slane %v595, %v599
          %602 = vmatprep.subr.mxu0 0.0
          %603 = vmatpush1.msra.mxu0 %v594
          %604 = vmatprep.subr.mxu0 0.0
          %605 = vmatpush1.msra.mxu0 %v593
          %606 = vmatprep.subr.mxu0 0.0
          %607 = vmatpush1.msra.mxu0 %v592
          %608 = vmatprep.subr.mxu0 0.0
          %609 = vmatpush1.msra.mxu0 %v591
          %610 = vmatprep.subr.mxu0 0.0
          %611 = vmatpush1.msra.mxu0 %v590
          %612 = vmatprep.subr.mxu0 0.0
          %613 = vmatpush1.msra.mxu0 %v589
          %614 = vmatprep.subr.mxu0 0.0
          %615 = vmatpush1.msra.mxu0 %v588
          %616 = vmatprep.subr.mxu0 0.0
          %617 = vmatpush1.msra.mxu0 %v587
          %618 = vmatprep.subr.mxu0 0.0
          %619 = vmatpush1.msra.mxu0 %v586
          %620 = vmatprep.subr.mxu0 0.0
          %621 = vmatpush1.msra.mxu0 %v585
          %622 = vmatprep.subr.mxu0 0.0
          %623 = vmatpush1.msra.mxu0 %v584
          %624 = vmatprep.subr.mxu0 0.0
          %625 = vmatpush1.msra.mxu0 %v583
          %626 = vmatprep.subr.mxu0 0.0
          %627 = vmatpush1.msra.mxu0 %v582
          %628 = vmatprep.subr.mxu0 0.0
          %629 = vmatpush1.msra.mxu0 %v581
          %630 = vmatprep.subr.mxu0 0.0
          %631 = vmatpush1.msra.mxu0 %v580
          %632 = vmatprep.subr.mxu0 0.0
          %633 = vmatpush1.msra.mxu0 %v579
          %634 = vmatprep.subr.mxu0 0.0
          %635 = vmatpush2.msra.mxu0 0.0
          %636 = vmatprep.subr.mxu0 0.0
          %637 = vmatpush2.msra.mxu0 0.0
          %638 = vmatprep.subr.mxu0 0.0
          %639 = vmatpush2.msra.mxu0 0.0
          %640 = vmatprep.subr.mxu0 0.0
          %641 = vmatpush2.msra.mxu0 0.0
          %642 = vmatprep.subr.mxu0 0.0
          %643 = vmatpush2.msra.mxu0 0.0
          %644 = vmatprep.subr.mxu0 0.0
          %645 = vmatpush2.msra.mxu0 0.0
          %646 = vmatprep.subr.mxu0 0.0
          %647 = vmatpush2.msra.mxu0 0.0
          %648 = vmatprep.subr.mxu0 0.0
          %649 = vmatpush2.msra.mxu0 0.0
          %650 = vmatprep.subr.mxu0 0.0
          %651 = vmatpush2.msra.mxu0 0.0
          %652 = vmatprep.subr.mxu0 0.0
          %653 = vmatpush2.msra.mxu0 0.0
          %654 = vmatprep.subr.mxu0 0.0
          %655 = vmatpush2.msra.mxu0 0.0
          %656 = vmatprep.subr.mxu0 0.0
          %657 = vmatpush2.msra.mxu0 0.0
          %658 = vmatprep.subr.mxu0 0.0
          %659 = vmatpush2.msra.mxu0 0.0
          %660 = vmatprep.subr.mxu0 0.0
          %661 = vmatpush2.msra.mxu0 0.0
          %662 = vmatprep.subr.mxu0 0.0
          %663 = vmatpush2.msra.mxu0 0.0
          %664 = vmatprep.subr.mxu0 0.0
          %665 = vmatpush2.msra.mxu0 0.0
          %666 = vmatprep.mubr.f32.mxu0 0.0
          %667 = vmatmul.mubr.f32.gmra.mxu0 %v578
          %v668 = vpop.f32.mrf.mxu0
          %v669 = vadd.f32 %v600, %v668
          %v670 = vpop.f32.mrf.mxu0
          %671 = vdwg.mxu0
          %v672 = vld [vmem:[#allocation2] sm:$0xff]
          %v673 = vld [vmem:[#allocation2 + $0x8] sm:$0xff]
          %v674 = vrcp.pop %v673
          %v675 = vmul.f32 %v672, %v674
          %v676 = vxor.u32 %v669, 2147483648
          %v677 = vmul.f32 %v676, 1.442695
          %v678 = vpow.pop %v677
          %v679 = vadd.f32 %v678, 1.0
          %v680 = vrcp.pop %v679
          %v681 = vmul.f32 1.0, %v680
          %v682 = vmul.f32 %v681, %v675
          %v683 = vld [vmem:[#allocation13] sm:$0xff]
          %v684 = vld [vmem:[#allocation13 + $0x8] sm:$0xff]
          %v685 = vld [vmem:[#allocation13 + $0x10] sm:$0xff]
          %v686 = vld [vmem:[#allocation13 + $0x18] sm:$0xff]
          %v687 = vld [vmem:[#allocation13 + $0x20] sm:$0xff]
          %v688 = vld [vmem:[#allocation13 + $0x28] sm:$0xff]
          %v689 = vld [vmem:[#allocation13 + $0x30] sm:$0xff]
          %v690 = vld [vmem:[#allocation13 + $0x38] sm:$0xff]
          %v691 = vld [vmem:[#allocation13 + $0x40] sm:$0xff]
          %v692 = vld [vmem:[#allocation13 + $0x48] sm:$0xff]
          %v693 = vld [vmem:[#allocation13 + $0x50] sm:$0xff]
          %v694 = vld [vmem:[#allocation13 + $0x58] sm:$0xff]
          %v695 = vld [vmem:[#allocation13 + $0x60] sm:$0xff]
          %v696 = vld [vmem:[#allocation13 + $0x68] sm:$0xff]
          %v697 = vld [vmem:[#allocation13 + $0x70] sm:$0xff]
          %v698 = vld [vmem:[#allocation13 + $0x78] sm:$0xff]
          %v699 = vld [vmem:[%s8] sm:$0x1]
          %v701 = vlaneseq
          %v702 = vshrl.u32 %v701, 7
          %v703 = vsub.s32 0, %v702
          %v704 = vrot.slane %v699, %v703
          %706 = vmatprep.subr.mxu0 0.0
          %707 = vmatpush1.msra.mxu0 %v698
          %708 = vmatprep.subr.mxu0 0.0
          %709 = vmatpush1.msra.mxu0 %v697
          %710 = vmatprep.subr.mxu0 0.0
          %711 = vmatpush1.msra.mxu0 %v696
          %712 = vmatprep.subr.mxu0 0.0
          %713 = vmatpush1.msra.mxu0 %v695
          %714 = vmatprep.subr.mxu0 0.0
          %715 = vmatpush1.msra.mxu0 %v694
          %716 = vmatprep.subr.mxu0 0.0
          %717 = vmatpush1.msra.mxu0 %v693
          %718 = vmatprep.subr.mxu0 0.0
          %719 = vmatpush1.msra.mxu0 %v692
          %720 = vmatprep.subr.mxu0 0.0
          %721 = vmatpush1.msra.mxu0 %v691
          %722 = vmatprep.subr.mxu0 0.0
          %723 = vmatpush1.msra.mxu0 %v690
          %724 = vmatprep.subr.mxu0 0.0
          %725 = vmatpush1.msra.mxu0 %v689
          %726 = vmatprep.subr.mxu0 0.0
          %727 = vmatpush1.msra.mxu0 %v688
          %728 = vmatprep.subr.mxu0 0.0
          %729 = vmatpush1.msra.mxu0 %v687
          %730 = vmatprep.subr.mxu0 0.0
          %731 = vmatpush1.msra.mxu0 %v686
          %732 = vmatprep.subr.mxu0 0.0
          %733 = vmatpush1.msra.mxu0 %v685
          %734 = vmatprep.subr.mxu0 0.0
          %735 = vmatpush1.msra.mxu0 %v684
          %736 = vmatprep.subr.mxu0 0.0
          %737 = vmatpush1.msra.mxu0 %v683
          %738 = vmatprep.subr.mxu0 0.0
          %739 = vmatpush2.msra.mxu0 0.0
          %740 = vmatprep.subr.mxu0 0.0
          %741 = vmatpush2.msra.mxu0 0.0
          %742 = vmatprep.subr.mxu0 0.0
          %743 = vmatpush2.msra.mxu0 0.0
          %744 = vmatprep.subr.mxu0 0.0
          %745 = vmatpush2.msra.mxu0 0.0
          %746 = vmatprep.subr.mxu0 0.0
          %747 = vmatpush2.msra.mxu0 0.0
          %748 = vmatprep.subr.mxu0 0.0
          %749 = vmatpush2.msra.mxu0 0.0
          %750 = vmatprep.subr.mxu0 0.0
          %751 = vmatpush2.msra.mxu0 0.0
          %752 = vmatprep.subr.mxu0 0.0
          %753 = vmatpush2.msra.mxu0 0.0
          %754 = vmatprep.subr.mxu0 0.0
          %755 = vmatpush2.msra.mxu0 0.0
          %756 = vmatprep.subr.mxu0 0.0
          %757 = vmatpush2.msra.mxu0 0.0
          %758 = vmatprep.subr.mxu0 0.0
          %759 = vmatpush2.msra.mxu0 0.0
          %760 = vmatprep.subr.mxu0 0.0
          %761 = vmatpush2.msra.mxu0 0.0
          %762 = vmatprep.subr.mxu0 0.0
          %763 = vmatpush2.msra.mxu0 0.0
          %764 = vmatprep.subr.mxu0 0.0
          %765 = vmatpush2.msra.mxu0 0.0
          %766 = vmatprep.subr.mxu0 0.0
          %767 = vmatpush2.msra.mxu0 0.0
          %768 = vmatprep.subr.mxu0 0.0
          %769 = vmatpush2.msra.mxu0 0.0
          %770 = vmatprep.mubr.f32.mxu0 0.0
          %771 = vmatmul.mubr.f32.gmra.mxu0 %v682
          %v772 = vpop.f32.mrf.mxu0
          %v773 = vadd.f32 %v704, %v772
          %v774 = vpop.f32.mrf.mxu0
          %775 = vdwg.mxu0
          %776 = vst [vmem:[%s464] sm:$0xff] %v773
        $region80: #{tpu_custom_call.1} parent=51 // pred_fallthru
          _
        %s777 = sand.u32 %s262, 1
        %s778 = scalar_lea.sflag [#allocation7], %s777
        %s779 = sand.u32 %s262, 1
        %s780 = smul.addr %s779, 8
        %s781 = scalar_lea.vmem [#allocation14], %s780
        // Predicated region
        $region81: #{tpu_custom_call.1} parent=51 // pred_check
          %p782 = pneg %p272
        $region82: #{tpu_custom_call.1} parent=51 // pred_check_branch
          %784 = sbr.rel (%p782) target = $region84
        $region83: #{tpu_custom_call.1} parent=51 // pred_region
          %s786 = ssub.s32 128, 128
          %787 = vsyncadd %s778, %s786
          %s788 = sadd.s32 %s37, %s36
          %s789 = smul.addr %s788, 128
          %s790 = scalar_lea.hbm %s9, %s789
          %s792 = sshll.u32 %s781, 4
          %s793 = int_to_ptr.vmem [resolvable:$true] %s792
          %795 = dma.vmem_to_hbm [thread:$0]  %s793, 128, %s790, %s778
        $region84: #{tpu_custom_call.1} parent=51 // pred_fallthru
          _
      $region52: #{tpu_custom_call.1} parent=5 // pred_fallthru
        _
      %p796 = scmp.le.s32.totalorder 2, %s26
      // Predicated region
      $region85: #{tpu_custom_call.1} parent=5 // pred_check
        %p797 = pneg %p796
      $region86: #{tpu_custom_call.1} parent=5 // pred_check_branch
        %799 = sbr.rel (%p797) target = $region88
      $region87: #{tpu_custom_call.1} parent=5 // pred_region
        %s800 = ssub.s32 %s26, 2
        // Predicated region
        $region89: #{tpu_custom_call.1} parent=87 // pred_check
          %p801 = pneg %p278
        $region90: #{tpu_custom_call.1} parent=87 // pred_check_branch
          %803 = sbr.rel (%p801) target = $region92
        $region91: #{tpu_custom_call.1} parent=87 // pred_region
          %s804 = sand.u32 %s263, 1
          %s805 = scalar_lea.sflag [#allocation7], %s804
          %s806 = sand.u32 %s263, 1
          %s807 = smul.addr %s806, 8
          %s808 = scalar_lea.vmem [#allocation14], %s807
          %809 = dma.done %s805, 128
        $region92: #{tpu_custom_call.1} parent=87 // pred_fallthru
          _
      $region88: #{tpu_custom_call.1} parent=5 // pred_fallthru
        _
    $region6: #{tpu_custom_call.1} parent=1 // loop_footer
      %s30 = sadd.s32 1, %s26
    $region7: #{tpu_custom_call.1} parent=1 // loop_footer_branch
      %25 = sbr.rel target = $region3
    $region8: #{tpu_custom_call.1} parent=1 // loop_exit
      _
    %810 = vsyncpa [#allocation6], 1
    %s811 = scalar_lea.sflag [#allocation6], 1
    %812 = vsyncpa %s811, 1
    %813 = vsyncpa [#allocation9], 1
    %s814 = scalar_lea.sflag [#allocation9], 1
    %815 = vsyncpa %s814, 1
    %816 = vsyncpa [#allocation12], 1
    %817 = vsyncpa [#allocation7], 1
    %s818 = scalar_lea.sflag [#allocation7], 1
    %819 = vsyncpa %s818, 1

</llo_original>
